<compile_context>
chip_gen: v7x
topology: tpu7x:2x2x1
jax: 0.10.0
libtpu: 0.0.40
codegen_flags: <defaults>
</compile_context>

<pallas_src>
import jax
import jax.numpy as jnp
from jax import lax
from jax.experimental import pallas as pl
from jax.experimental.pallas import tpu as pltpu


# ----------------------------------------------------------------------------
# Pallas kernel: one (direction, time-chunk) step of a bidirectional LSTM layer.
# Grid = (2, num_chunks); direction "parallel", chunk "arbitrary".
# ----------------------------------------------------------------------------
def _bilstm_chunk_kernel(len_ref, gx_ref, whh_ref,        # inputs
                         out_ref, hn_ref, cn_ref,         # outputs
                         h_carry, c_carry):               # VMEM scratch
    """
    len_ref : [B, H]         f32   sequence lengths broadcast along H
    gx_ref  : [1, Tc, B, 4H] bf16  x @ W_ih + b for this direction / chunk
    whh_ref : [1, H, 4H]     bf16  recurrent weights for this direction
    out_ref : [Tc, 1, B, H]  f32   per-timestep hidden output (zero past length)
    hn_ref  : [1, B, H]      f32   final hidden state (value after last chunk)
    cn_ref  : [1, B, H]      f32   final cell state
    h_carry : [B, H]         f32   hidden state carried across chunks
    c_carry : [B, H]         f32   cell state carried across chunks
    """
    d = pl.program_id(0)
    c = pl.program_id(1)
    n_chunks = pl.num_programs(1)
    Tc = gx_ref.shape[1]
    H = hn_ref.shape[-1]

    @pl.when(c == 0)
    def _():
        h_carry[...] = jnp.zeros_like(h_carry)
        c_carry[...] = jnp.zeros_like(c_carry)

    whh = whh_ref[0]                                    # [H, 4H] bf16

    # Original-time chunk handled at this grid step (reversed for d == 1),
    # matching the gx / out index_maps.
    chunk = c + d * (n_chunks - 1 - 2 * c)
    # valid(t) == t < length  <=>  local_t < length - chunk*Tc   (hoisted)
    thresh = len_ref[...] - (chunk * Tc).astype(jnp.float32)    # [B, H]
    # forward walks local_t = 0..Tc-1, backward walks Tc-1..0
    t0 = d * (Tc - 1)
    stride = 1 - 2 * d

    def step(s, carry):
        h_prev, c_prev = carry
        lt = t0 + stride * s
        # Single fused lane-dense 4H-wide gate GEMM; only the recurrent half of
        # the gate pre-activation lives inside the serial loop.
        g = gx_ref[0, lt].astype(jnp.float32) + jnp.dot(
            h_prev.astype(whh.dtype), whh, preferred_element_type=jnp.float32)
        # gate layout along 4H is (i, f, o | g): one contiguous sigmoid + tanh
        sg = jax.nn.sigmoid(g[:, :3 * H])
        i_g = sg[:, 0 * H:1 * H]
        f_g = sg[:, 1 * H:2 * H]
        o_g = sg[:, 2 * H:3 * H]
        g_g = jnp.tanh(g[:, 3 * H:])
        c_new = f_g * c_prev + i_g * g_g
        h_new = o_g * jnp.tanh(c_new)
        valid = lt.astype(jnp.float32) < thresh          # [B, H]
        out_ref[lt, 0] = jnp.where(valid, h_new, 0.0)    # zero-pad past length
        # freeze state past length (packed-sequence semantics)
        return (jnp.where(valid, h_new, h_prev),
                jnp.where(valid, c_new, c_prev))

    unroll = 4 if Tc % 4 == 0 else (2 if Tc % 2 == 0 else 1)
    h_fin, c_fin = lax.fori_loop(0, Tc, step, (h_carry[...], c_carry[...]),
                                 unroll=unroll)
    h_carry[...] = h_fin
    c_carry[...] = c_fin
    # hn/cn blocks are VMEM-resident across the chunk axis; the value written at
    # the last chunk is what gets written back to HBM.
    hn_ref[0] = h_fin
    cn_ref[0] = c_fin


def bilstm_recurrence_pallas(gx, lengths, whh, time_chunk):
    """Bidirectional LSTM recurrence over precomputed gate inputs.

    gx      : [2, Tp, Bp, 4H] bf16   (x @ W_ih + b, per direction)
    lengths : [Bp]            int32
    whh     : [2, H, 4H]      bf16
    Returns out [Tp, 2, Bp, H] f32, h_n [2, Bp, H] f32, c_n [2, Bp, H] f32.
    """
    _, Tp, Bp, H4 = gx.shape
    H = H4 // 4
    Tc = time_chunk
    assert Tp % Tc == 0
    n_chunks = Tp // Tc

    len_bh = jnp.broadcast_to(lengths.astype(jnp.float32)[:, None], (Bp, H))

    def chunk_sel(d, c):        # reverse chunk order for the backward direction
        return c + d * (n_chunks - 1 - 2 * c)

    return pl.pallas_call(
        _bilstm_chunk_kernel,
        out_shape=(jax.ShapeDtypeStruct((Tp, 2, Bp, H), jnp.float32),
                   jax.ShapeDtypeStruct((2, Bp, H), jnp.float32),
                   jax.ShapeDtypeStruct((2, Bp, H), jnp.float32)),
        grid_spec=pltpu.PrefetchScalarGridSpec(
            num_scalar_prefetch=0,
            grid=(2, n_chunks),                            # (direction, chunk)
            in_specs=[
                pl.BlockSpec((Bp, H), lambda d, c: (0, 0)),              # lengths
                pl.BlockSpec((1, Tc, Bp, H4),
                             lambda d, c: (d, chunk_sel(d, c), 0, 0)),   # gx
                pl.BlockSpec((1, H, H4), lambda d, c: (d, 0, 0)),        # W_hh
            ],
            out_specs=(
                pl.BlockSpec((Tc, 1, Bp, H),
                             lambda d, c: (chunk_sel(d, c), d, 0, 0)),   # out
                pl.BlockSpec((1, Bp, H), lambda d, c: (d, 0, 0)),        # h_n
                pl.BlockSpec((1, Bp, H), lambda d, c: (d, 0, 0)),        # c_n
            ),
            scratch_shapes=[pltpu.VMEM((Bp, H), jnp.float32),
                            pltpu.VMEM((Bp, H), jnp.float32)],
        ),
        compiler_params=pltpu.CompilerParams(
            # Directions are independent (may shard across TCs on v7x); the
            # chunk axis carries the h/c state -> "arbitrary".
            dimension_semantics=("parallel", "arbitrary"),
            vmem_limit_bytes=48 * 1024 * 1024),
    )(len_bh, gx, whh)


# ----------------------------------------------------------------------------
# Pure-JAX reference recurrence (identical math / bf16-gx recipe).
# ----------------------------------------------------------------------------
def bilstm_recurrence_ref(gx, lengths, whh, time_chunk):
    del time_chunk
    _, Tp, Bp, H4 = gx.shape
    H = H4 // 4
    out = jnp.zeros((Tp, 2, Bp, H), jnp.float32)
    hs, cs = [], []
    for d in range(2):
        h = jnp.zeros((Bp, H), jnp.float32)
        c = jnp.zeros((Bp, H), jnp.float32)
        order = range(Tp) if d == 0 else range(Tp - 1, -1, -1)
        for t in order:
            g = gx[d, t].astype(jnp.float32) + jnp.dot(
                h.astype(jnp.bfloat16), whh[d],
                preferred_element_type=jnp.float32)
            sg = jax.nn.sigmoid(g[:, :3 * H])
            i_g, f_g, o_g = sg[:, :H], sg[:, H:2 * H], sg[:, 2 * H:3 * H]
            g_g = jnp.tanh(g[:, 3 * H:])
            c_new = f_g * c + i_g * g_g
            h_new = o_g * jnp.tanh(c_new)
            valid = (t < lengths)[:, None]
            out = out.at[t, d].set(jnp.where(valid, h_new, 0.0))
            h = jnp.where(valid, h_new, h)
            c = jnp.where(valid, c_new, c)
        hs.append(h)
        cs.append(c)
    return out, jnp.stack(hs, 0), jnp.stack(cs, 0)


# ----------------------------------------------------------------------------
# Full Encoder.forward
# ----------------------------------------------------------------------------
def _pick_time_chunk(T, Bp, H, vmem_budget_bytes=12 * 1024 * 1024):
    """Chunk length sized so the double-buffered bf16 gx chunk + f32 out chunk
    stay within a conservative VMEM budget (v7x 64 MiB/TC is binding)."""
    per_step = Bp * (4 * H) * 2 * 2 + Bp * H * 4 * 2
    tc = max(1, vmem_budget_bytes // per_step)
    tc = min(tc, T)
    if tc >= 4:
        tc -= tc % 4
    return int(tc)


def encoder_forward(params, X, X_lengths, recurrence_fn, time_chunk=None):
    """Forward pass of the Encoder (eval mode: both dropouts are identity)."""
    B, T = X.shape
    H = params["lstm"][0]["whh"].shape[1]          # per-direction hidden size

    # nn.Embedding lookup (gather) + dropout (identity in eval) as XLA glue.
    emb = params["embedding"][X]                   # [B, T, E]
    x = jnp.transpose(emb, (1, 0, 2))              # [T, B, E] time-major
    lengths = X_lengths.astype(jnp.int32)          # [B]

    # Pad batch to a multiple of 8 (f32 sublane / MXU rows); padded rows get
    # length 0 so they stay exactly zero.  Pad time to a multiple of the chunk.
    Bp = max(8, ((B + 7) // 8) * 8)
    Tc = time_chunk if time_chunk is not None else _pick_time_chunk(T, Bp, H)
    Tc = max(1, min(int(Tc), T))
    Tp = ((T + Tc - 1) // Tc) * Tc
    x = jnp.pad(x, ((0, Tp - T), (0, Bp - B), (0, 0)))
    lengths_p = jnp.pad(lengths, (0, Bp - B))

    prev = x                                       # layer-0 input [Tp, Bp, E]
    h_list, c_list = [], []
    for li, lp in enumerate(params["lstm"]):
        wih, whh, b = lp["wih"], lp["whh"], lp["b"]
        # Input projection hoisted out of the recurrence: one batched bf16 GEMM
        # per layer (XLA) with f32 accumulation, bias folded in.
        if li == 0:
            gx = jnp.einsum("tbe,dek->dtbk", prev.astype(jnp.bfloat16), wih,
                            preferred_element_type=jnp.float32)
        else:
            # Previous layer output stays in its [Tp, 2, Bp, H] kernel layout;
            # fold the (direction, H) axes into W_ih so no [T,B,2H] concat is
            # ever materialised between layers.
            wih_r = wih.reshape(2, 2, H, 4 * H)
            gx = jnp.einsum("tjbh,djhk->dtbk", prev.astype(jnp.bfloat16), wih_r,
                            preferred_element_type=jnp.float32)
        gx = (gx + b[:, None, None, :]).astype(jnp.bfloat16)   # bf16 gx stream
        prev, h_n, c_n = recurrence_fn(gx, lengths_p, whh, Tc)
        # inter-layer lstm_dropout: identity in eval mode.
        h_list.append(h_n[:, :B])
        c_list.append(c_n[:, :B])

    out = prev[:T, :, :B]                                      # [T, 2, B, H]
    # batch-first output, features = concat(fwd, bwd): [B, T, 2H]
    output = jnp.transpose(out, (2, 0, 1, 3)).reshape(B, T, 2 * H)
    h_n = jnp.concatenate(h_list, axis=0)                      # [L*2, B, H]
    c_n = jnp.concatenate(c_list, axis=0)
    return {"output": output, "states": (h_n, c_n)}


# ----------------------------------------------------------------------------
# Deterministic parameter init.  Shapes mirror nn.Embedding / nn.LSTM with the
# four gate blocks pre-concatenated along 4H in (i, f, o, g) order (PyTorch
# stores (i, f, g, o); converting a checkpoint just permutes the 4H columns).
# ----------------------------------------------------------------------------
def init_params(key, vocab_size, emb_dim, hidden_dim, num_layers):
    H = hidden_dim // 2
    keys = jax.random.split(key, 1 + 4 * num_layers)
    params = {"embedding": jax.random.normal(keys[0], (vocab_size, emb_dim),
                                             jnp.float32) * 0.1}
    bound = 1.0 / (H ** 0.5)
    lstm = []
    idx = 1
    for l in range(num_layers):
        in_dim = emb_dim if l == 0 else hidden_dim
        k1, k2, k3, k4 = keys[idx:idx + 4]
        idx += 4
        wih = jax.random.uniform(k1, (2, in_dim, 4 * H), jnp.float32, -bound, bound)
        whh = jax.random.uniform(k2, (2, H, 4 * H), jnp.float32, -bound, bound)
        b_ih = jax.random.uniform(k3, (2, 4 * H), jnp.float32, -bound, bound)
        b_hh = jax.random.uniform(k4, (2, 4 * H), jnp.float32, -bound, bound)
        lstm.append({"wih": wih.astype(jnp.bfloat16),   # bf16 = native MXU dtype
                     "whh": whh.astype(jnp.bfloat16),
                     "b": b_ih + b_hh})                 # bias stays f32
    params["lstm"] = lstm
    return params


if __name__ == "__main__":
    vocab_size, emb_dim, hidden_dim, num_layers = 50, 32, 64, 2
    B, T = 4, 12

    key = jax.random.PRNGKey(0)
    k_p, k_x = jax.random.split(key)
    params = init_params(k_p, vocab_size, emb_dim, hidden_dim, num_layers)

    X = jax.random.randint(k_x, (B, T), 0, vocab_size, dtype=jnp.int32)
    X_lengths = jnp.array([12, 9, 5, 2], dtype=jnp.int32)   # sorted descending

    # time_chunk=4 -> 3 chunks: exercises the chunked h/c carry and the reverse
    # chunk traversal of the backward direction.
    res = encoder_forward(params, X, X_lengths, bilstm_recurrence_pallas,
                          time_chunk=4)
    res = jax.block_until_ready(res)

    # Pure-JAX reference with the identical bf16-gx / f32-state recipe.
    ref = encoder_forward(params, X, X_lengths, bilstm_recurrence_ref,
                          time_chunk=4)

    assert res["output"].shape == (B, T, hidden_dim)
    assert res["states"][0].shape == (num_layers * 2, B, hidden_dim // 2)
    assert res["states"][1].shape == (num_layers * 2, B, hidden_dim // 2)
    assert jnp.allclose(res["output"], ref["output"], atol=5e-3, rtol=5e-3)
    assert jnp.allclose(res["states"][0], ref["states"][0], atol=5e-3, rtol=5e-3)
    assert jnp.allclose(res["states"][1], ref["states"][1], atol=5e-3, rtol=5e-3)

    print("KERNEL_OK")
</pallas_src>

<mosaic_0001>
module attributes {stable_mosaic.version = 11 : i64} {
  func.func @_bilstm_chunk_kernel(%arg0: i32, %arg1: i32, %arg2: memref<8x32xf32, #tpu.memory_space<vmem>>, %arg3: memref<1x4x8x128xbf16, #tpu.memory_space<vmem>>, %arg4: memref<1x32x128xbf16, #tpu.memory_space<vmem>>, %arg5: memref<4x1x8x32xf32, #tpu.memory_space<vmem>>, %arg6: memref<1x8x32xf32, #tpu.memory_space<vmem>>, %arg7: memref<1x8x32xf32, #tpu.memory_space<vmem>>, %arg8: memref<8x32xf32, #tpu.memory_space<vmem>>, %arg9: memref<8x32xf32, #tpu.memory_space<vmem>>) attributes {dimension_semantics = [#tpu.dimension_semantics<parallel>, #tpu.dimension_semantics<arbitrary>], iteration_bounds = array<i64: 2, 3>, scalar_prefetch = 0 : i64, scratch_operands = 2 : i64, tpu.core_type = #tpu.core_type<tc>, window_params = [{pipeline_mode = #tpu.pipeline_mode<synchronous>, transform_indices = @transform_0, window_bounds = array<i64: 8, 32>}, {transform_indices = @transform_1, window_bounds = array<i64: 1, 4, 8, 128>}, {transform_indices = @transform_2, window_bounds = array<i64: 1, 32, 128>}, {transform_indices = @transform_3, window_bounds = array<i64: 4, 1, 8, 32>}, {transform_indices = @transform_4, window_bounds = array<i64: 1, 8, 32>}, {transform_indices = @transform_5, window_bounds = array<i64: 1, 8, 32>}]} {
    %c0_i32 = arith.constant 0 : i32
    %0 = arith.cmpi eq, %arg1, %c0_i32 : i32
    %1 = arith.extui %0 : i1 to i32
    %c0_i32_0 = arith.constant 0 : i32
    %2 = arith.cmpi ne, %1, %c0_i32_0 : i32
    scf.if %2 {
      %cst_61 = arith.constant 0.000000e+00 : f32
      %171 = vector.broadcast %cst_61 : f32 to vector<8x32xf32>
      %c0_62 = arith.constant 0 : index
      %c0_63 = arith.constant 0 : index
      %172 = vector.load %arg8[%c0_62, %c0_63] : memref<8x32xf32, #tpu.memory_space<vmem>>, vector<8x32xf32>
      tpu.vector_store %arg8[%c0_62, %c0_63], %171 {strides = array<i32>} : memref<8x32xf32, #tpu.memory_space<vmem>>, vector<8x32xf32>,
      %cst_64 = arith.constant 0.000000e+00 : f32
      %173 = vector.broadcast %cst_64 : f32 to vector<8x32xf32>
      %c0_65 = arith.constant 0 : index
      %c0_66 = arith.constant 0 : index
      %174 = vector.load %arg9[%c0_65, %c0_66] : memref<8x32xf32, #tpu.memory_space<vmem>>, vector<8x32xf32>
      tpu.vector_store %arg9[%c0_65, %c0_66], %173 {strides = array<i32>} : memref<8x32xf32, #tpu.memory_space<vmem>>, vector<8x32xf32>,
    } else {
    }
    %c0 = arith.constant 0 : index
    %c0_1 = arith.constant 0 : index
    %c0_2 = arith.constant 0 : index
    %3 = vector.load %arg4[%c0, %c0_1, %c0_2] : memref<1x32x128xbf16, #tpu.memory_space<vmem>>, vector<1x32x128xbf16>
    %4 = vector.shape_cast %3 : vector<1x32x128xbf16> to vector<32x128xbf16>
    %c2_i32 = arith.constant 2 : i32
    %5 = arith.muli %c2_i32, %arg1 : i32
    %c2_i32_3 = arith.constant 2 : i32
    %6 = arith.subi %c2_i32_3, %5 : i32
    %7 = arith.muli %arg0, %6 : i32
    %8 = arith.addi %arg1, %7 : i32
    %c0_4 = arith.constant 0 : index
    %c0_5 = arith.constant 0 : index
    %9 = vector.load %arg2[%c0_4, %c0_5] : memref<8x32xf32, #tpu.memory_space<vmem>>, vector<8x32xf32>
    %c4_i32 = arith.constant 4 : i32
    %10 = arith.muli %8, %c4_i32 : i32
    %11 = arith.sitofp %10 : i32 to f32
    %12 = vector.broadcast %11 : f32 to vector<8x32xf32>
    %13 = arith.subf %9, %12 : vector<8x32xf32>
    %c3_i32 = arith.constant 3 : i32
    %14 = arith.muli %arg0, %c3_i32 : i32
    %c2_i32_6 = arith.constant 2 : i32
    %15 = arith.muli %c2_i32_6, %arg0 : i32
    %c1_i32 = arith.constant 1 : i32
    %16 = arith.subi %c1_i32, %15 : i32
    %c0_7 = arith.constant 0 : index
    %c0_8 = arith.constant 0 : index
    %17 = vector.load %arg8[%c0_7, %c0_8] : memref<8x32xf32, #tpu.memory_space<vmem>>, vector<8x32xf32>
    %c0_9 = arith.constant 0 : index
    %c0_10 = arith.constant 0 : index
    %18 = vector.load %arg9[%c0_9, %c0_10] : memref<8x32xf32, #tpu.memory_space<vmem>>, vector<8x32xf32>
    %c0_i32_11 = arith.constant 0 : i32
    %19 = arith.muli %16, %c0_i32_11 : i32
    %20 = arith.addi %14, %19 : i32
    %c0_12 = arith.constant 0 : index
    %21 = arith.index_cast %20 : i32 to index
    %c0_13 = arith.constant 0 : index
    %c0_14 = arith.constant 0 : index
    %22 = vector.load %arg3[%c0_12, %21, %c0_13, %c0_14] : memref<1x4x8x128xbf16, #tpu.memory_space<vmem>>, vector<1x1x8x128xbf16>
    %23 = vector.shape_cast %22 : vector<1x1x8x128xbf16> to vector<8x128xbf16>
    %24 = arith.extf %23 : vector<8x128xbf16> to vector<8x128xf32>
    %25 = arith.truncf %17 : vector<8x32xf32> to vector<8x32xbf16>
    %cst = arith.constant dense<0.000000e+00> : vector<8x128xf32>
    %26 = tpu.matmul %25, %4, %cst {dimension_numbers = #tpu.dot_dimension_numbers<[1], [0], [0], [1], [0, 0, 1, 1], [], []>} : vector<8x32xbf16>, vector<32x128xbf16>, vector<8x128xf32> -> vector<8x128xf32>
    %27 = arith.addf %24, %26 : vector<8x128xf32>
    %28 = vector.extract_strided_slice %27 {offsets = [0, 0], sizes = [8, 96], strides = [1, 1]} : vector<8x128xf32> to vector<8x96xf32>
    %29 = arith.negf %28 : vector<8x96xf32>
    %30 = math.exp %29 : vector<8x96xf32>
    %cst_15 = arith.constant 1.000000e+00 : f32
    %31 = vector.broadcast %cst_15 : f32 to vector<8x96xf32>
    %32 = arith.addf %31, %30 : vector<8x96xf32>
    %33 = arith.divf %31, %32 : vector<8x96xf32>
    %34 = vector.extract_strided_slice %33 {offsets = [0, 0], sizes = [8, 32], strides = [1, 1]} : vector<8x96xf32> to vector<8x32xf32>
    %35 = vector.extract_strided_slice %33 {offsets = [0, 32], sizes = [8, 32], strides = [1, 1]} : vector<8x96xf32> to vector<8x32xf32>
    %36 = vector.extract_strided_slice %33 {offsets = [0, 64], sizes = [8, 32], strides = [1, 1]} : vector<8x96xf32> to vector<8x32xf32>
    %37 = vector.extract_strided_slice %27 {offsets = [0, 96], sizes = [8, 32], strides = [1, 1]} : vector<8x128xf32> to vector<8x32xf32>
    %38 = math.tanh %37 : vector<8x32xf32>
    %39 = arith.mulf %35, %18 : vector<8x32xf32>
    %40 = arith.mulf %34, %38 : vector<8x32xf32>
    %41 = arith.addf %39, %40 : vector<8x32xf32>
    %42 = math.tanh %41 : vector<8x32xf32>
    %43 = arith.mulf %36, %42 : vector<8x32xf32>
    %44 = arith.sitofp %20 : i32 to f32
    %45 = vector.broadcast %44 : f32 to vector<8x32xf32>
    %46 = arith.cmpf olt, %45, %13 : vector<8x32xf32>
    %cst_16 = arith.constant 0.000000e+00 : f32
    %47 = vector.broadcast %cst_16 : f32 to vector<8x32xf32>
    %48 = arith.select %46, %43, %47 : vector<8x32xi1>, vector<8x32xf32>
    %49 = arith.index_cast %20 : i32 to index
    %c0_17 = arith.constant 0 : index
    %c0_18 = arith.constant 0 : index
    %c0_19 = arith.constant 0 : index
    %50 = vector.load %arg5[%49, %c0_17, %c0_18, %c0_19] : memref<4x1x8x32xf32, #tpu.memory_space<vmem>>, vector<1x1x8x32xf32>
    %51 = vector.shape_cast %50 : vector<1x1x8x32xf32> to vector<8x32xf32>
    %52 = vector.shape_cast %48 : vector<8x32xf32> to vector<1x1x8x32xf32>
    tpu.vector_store %arg5[%49, %c0_17, %c0_18, %c0_19], %52 {strides = array<i32>} : memref<4x1x8x32xf32, #tpu.memory_space<vmem>>, vector<1x1x8x32xf32>,
    %53 = arith.select %46, %43, %17 : vector<8x32xi1>, vector<8x32xf32>
    %54 = arith.select %46, %41, %18 : vector<8x32xi1>, vector<8x32xf32>
    %c1_i32_20 = arith.constant 1 : i32
    %55 = arith.muli %16, %c1_i32_20 : i32
    %56 = arith.addi %14, %55 : i32
    %c0_21 = arith.constant 0 : index
    %57 = arith.index_cast %56 : i32 to index
    %c0_22 = arith.constant 0 : index
    %c0_23 = arith.constant 0 : index
    %58 = vector.load %arg3[%c0_21, %57, %c0_22, %c0_23] : memref<1x4x8x128xbf16, #tpu.memory_space<vmem>>, vector<1x1x8x128xbf16>
    %59 = vector.shape_cast %58 : vector<1x1x8x128xbf16> to vector<8x128xbf16>
    %60 = arith.extf %59 : vector<8x128xbf16> to vector<8x128xf32>
    %61 = arith.truncf %53 : vector<8x32xf32> to vector<8x32xbf16>
    %cst_24 = arith.constant dense<0.000000e+00> : vector<8x128xf32>
    %62 = tpu.matmul %61, %4, %cst_24 {dimension_numbers = #tpu.dot_dimension_numbers<[1], [0], [0], [1], [0, 0, 1, 1], [], []>} : vector<8x32xbf16>, vector<32x128xbf16>, vector<8x128xf32> -> vector<8x128xf32>
    %63 = arith.addf %60, %62 : vector<8x128xf32>
    %64 = vector.extract_strided_slice %63 {offsets = [0, 0], sizes = [8, 96], strides = [1, 1]} : vector<8x128xf32> to vector<8x96xf32>
    %65 = arith.negf %64 : vector<8x96xf32>
    %66 = math.exp %65 : vector<8x96xf32>
    %cst_25 = arith.constant 1.000000e+00 : f32
    %67 = vector.broadcast %cst_25 : f32 to vector<8x96xf32>
    %68 = arith.addf %67, %66 : vector<8x96xf32>
    %69 = arith.divf %67, %68 : vector<8x96xf32>
    %70 = vector.extract_strided_slice %69 {offsets = [0, 0], sizes = [8, 32], strides = [1, 1]} : vector<8x96xf32> to vector<8x32xf32>
    %71 = vector.extract_strided_slice %69 {offsets = [0, 32], sizes = [8, 32], strides = [1, 1]} : vector<8x96xf32> to vector<8x32xf32>
    %72 = vector.extract_strided_slice %69 {offsets = [0, 64], sizes = [8, 32], strides = [1, 1]} : vector<8x96xf32> to vector<8x32xf32>
    %73 = vector.extract_strided_slice %63 {offsets = [0, 96], sizes = [8, 32], strides = [1, 1]} : vector<8x128xf32> to vector<8x32xf32>
    %74 = math.tanh %73 : vector<8x32xf32>
    %75 = arith.mulf %71, %54 : vector<8x32xf32>
    %76 = arith.mulf %70, %74 : vector<8x32xf32>
    %77 = arith.addf %75, %76 : vector<8x32xf32>
    %78 = math.tanh %77 : vector<8x32xf32>
    %79 = arith.mulf %72, %78 : vector<8x32xf32>
    %80 = arith.sitofp %56 : i32 to f32
    %81 = vector.broadcast %80 : f32 to vector<8x32xf32>
    %82 = arith.cmpf olt, %81, %13 : vector<8x32xf32>
    %cst_26 = arith.constant 0.000000e+00 : f32
    %83 = vector.broadcast %cst_26 : f32 to vector<8x32xf32>
    %84 = arith.select %82, %79, %83 : vector<8x32xi1>, vector<8x32xf32>
    %85 = arith.index_cast %56 : i32 to index
    %c0_27 = arith.constant 0 : index
    %c0_28 = arith.constant 0 : index
    %c0_29 = arith.constant 0 : index
    %86 = vector.load %arg5[%85, %c0_27, %c0_28, %c0_29] : memref<4x1x8x32xf32, #tpu.memory_space<vmem>>, vector<1x1x8x32xf32>
    %87 = vector.shape_cast %86 : vector<1x1x8x32xf32> to vector<8x32xf32>
    %88 = vector.shape_cast %84 : vector<8x32xf32> to vector<1x1x8x32xf32>
    tpu.vector_store %arg5[%85, %c0_27, %c0_28, %c0_29], %88 {strides = array<i32>} : memref<4x1x8x32xf32, #tpu.memory_space<vmem>>, vector<1x1x8x32xf32>,
    %89 = arith.select %82, %79, %53 : vector<8x32xi1>, vector<8x32xf32>
    %90 = arith.select %82, %77, %54 : vector<8x32xi1>, vector<8x32xf32>
    %c2_i32_30 = arith.constant 2 : i32
    %91 = arith.muli %16, %c2_i32_30 : i32
    %92 = arith.addi %14, %91 : i32
    %c0_31 = arith.constant 0 : index
    %93 = arith.index_cast %92 : i32 to index
    %c0_32 = arith.constant 0 : index
    %c0_33 = arith.constant 0 : index
    %94 = vector.load %arg3[%c0_31, %93, %c0_32, %c0_33] : memref<1x4x8x128xbf16, #tpu.memory_space<vmem>>, vector<1x1x8x128xbf16>
    %95 = vector.shape_cast %94 : vector<1x1x8x128xbf16> to vector<8x128xbf16>
    %96 = arith.extf %95 : vector<8x128xbf16> to vector<8x128xf32>
    %97 = arith.truncf %89 : vector<8x32xf32> to vector<8x32xbf16>
    %cst_34 = arith.constant dense<0.000000e+00> : vector<8x128xf32>
    %98 = tpu.matmul %97, %4, %cst_34 {dimension_numbers = #tpu.dot_dimension_numbers<[1], [0], [0], [1], [0, 0, 1, 1], [], []>} : vector<8x32xbf16>, vector<32x128xbf16>, vector<8x128xf32> -> vector<8x128xf32>
    %99 = arith.addf %96, %98 : vector<8x128xf32>
    %100 = vector.extract_strided_slice %99 {offsets = [0, 0], sizes = [8, 96], strides = [1, 1]} : vector<8x128xf32> to vector<8x96xf32>
    %101 = arith.negf %100 : vector<8x96xf32>
    %102 = math.exp %101 : vector<8x96xf32>
    %cst_35 = arith.constant 1.000000e+00 : f32
    %103 = vector.broadcast %cst_35 : f32 to vector<8x96xf32>
    %104 = arith.addf %103, %102 : vector<8x96xf32>
    %105 = arith.divf %103, %104 : vector<8x96xf32>
    %106 = vector.extract_strided_slice %105 {offsets = [0, 0], sizes = [8, 32], strides = [1, 1]} : vector<8x96xf32> to vector<8x32xf32>
    %107 = vector.extract_strided_slice %105 {offsets = [0, 32], sizes = [8, 32], strides = [1, 1]} : vector<8x96xf32> to vector<8x32xf32>
    %108 = vector.extract_strided_slice %105 {offsets = [0, 64], sizes = [8, 32], strides = [1, 1]} : vector<8x96xf32> to vector<8x32xf32>
    %109 = vector.extract_strided_slice %99 {offsets = [0, 96], sizes = [8, 32], strides = [1, 1]} : vector<8x128xf32> to vector<8x32xf32>
    %110 = math.tanh %109 : vector<8x32xf32>
    %111 = arith.mulf %107, %90 : vector<8x32xf32>
    %112 = arith.mulf %106, %110 : vector<8x32xf32>
    %113 = arith.addf %111, %112 : vector<8x32xf32>
    %114 = math.tanh %113 : vector<8x32xf32>
    %115 = arith.mulf %108, %114 : vector<8x32xf32>
    %116 = arith.sitofp %92 : i32 to f32
    %117 = vector.broadcast %116 : f32 to vector<8x32xf32>
    %118 = arith.cmpf olt, %117, %13 : vector<8x32xf32>
    %cst_36 = arith.constant 0.000000e+00 : f32
    %119 = vector.broadcast %cst_36 : f32 to vector<8x32xf32>
    %120 = arith.select %118, %115, %119 : vector<8x32xi1>, vector<8x32xf32>
    %121 = arith.index_cast %92 : i32 to index
    %c0_37 = arith.constant 0 : index
    %c0_38 = arith.constant 0 : index
    %c0_39 = arith.constant 0 : index
    %122 = vector.load %arg5[%121, %c0_37, %c0_38, %c0_39] : memref<4x1x8x32xf32, #tpu.memory_space<vmem>>, vector<1x1x8x32xf32>
    %123 = vector.shape_cast %122 : vector<1x1x8x32xf32> to vector<8x32xf32>
    %124 = vector.shape_cast %120 : vector<8x32xf32> to vector<1x1x8x32xf32>
    tpu.vector_store %arg5[%121, %c0_37, %c0_38, %c0_39], %124 {strides = array<i32>} : memref<4x1x8x32xf32, #tpu.memory_space<vmem>>, vector<1x1x8x32xf32>,
    %125 = arith.select %118, %115, %89 : vector<8x32xi1>, vector<8x32xf32>
    %126 = arith.select %118, %113, %90 : vector<8x32xi1>, vector<8x32xf32>
    %c3_i32_40 = arith.constant 3 : i32
    %127 = arith.muli %16, %c3_i32_40 : i32
    %128 = arith.addi %14, %127 : i32
    %c0_41 = arith.constant 0 : index
    %129 = arith.index_cast %128 : i32 to index
    %c0_42 = arith.constant 0 : index
    %c0_43 = arith.constant 0 : index
    %130 = vector.load %arg3[%c0_41, %129, %c0_42, %c0_43] : memref<1x4x8x128xbf16, #tpu.memory_space<vmem>>, vector<1x1x8x128xbf16>
    %131 = vector.shape_cast %130 : vector<1x1x8x128xbf16> to vector<8x128xbf16>
    %132 = arith.extf %131 : vector<8x128xbf16> to vector<8x128xf32>
    %133 = arith.truncf %125 : vector<8x32xf32> to vector<8x32xbf16>
    %cst_44 = arith.constant dense<0.000000e+00> : vector<8x128xf32>
    %134 = tpu.matmul %133, %4, %cst_44 {dimension_numbers = #tpu.dot_dimension_numbers<[1], [0], [0], [1], [0, 0, 1, 1], [], []>} : vector<8x32xbf16>, vector<32x128xbf16>, vector<8x128xf32> -> vector<8x128xf32>
    %135 = arith.addf %132, %134 : vector<8x128xf32>
    %136 = vector.extract_strided_slice %135 {offsets = [0, 0], sizes = [8, 96], strides = [1, 1]} : vector<8x128xf32> to vector<8x96xf32>
    %137 = arith.negf %136 : vector<8x96xf32>
    %138 = math.exp %137 : vector<8x96xf32>
    %cst_45 = arith.constant 1.000000e+00 : f32
    %139 = vector.broadcast %cst_45 : f32 to vector<8x96xf32>
    %140 = arith.addf %139, %138 : vector<8x96xf32>
    %141 = arith.divf %139, %140 : vector<8x96xf32>
    %142 = vector.extract_strided_slice %141 {offsets = [0, 0], sizes = [8, 32], strides = [1, 1]} : vector<8x96xf32> to vector<8x32xf32>
    %143 = vector.extract_strided_slice %141 {offsets = [0, 32], sizes = [8, 32], strides = [1, 1]} : vector<8x96xf32> to vector<8x32xf32>
    %144 = vector.extract_strided_slice %141 {offsets = [0, 64], sizes = [8, 32], strides = [1, 1]} : vector<8x96xf32> to vector<8x32xf32>
    %145 = vector.extract_strided_slice %135 {offsets = [0, 96], sizes = [8, 32], strides = [1, 1]} : vector<8x128xf32> to vector<8x32xf32>
    %146 = math.tanh %145 : vector<8x32xf32>
    %147 = arith.mulf %143, %126 : vector<8x32xf32>
    %148 = arith.mulf %142, %146 : vector<8x32xf32>
    %149 = arith.addf %147, %148 : vector<8x32xf32>
    %150 = math.tanh %149 : vector<8x32xf32>
    %151 = arith.mulf %144, %150 : vector<8x32xf32>
    %152 = arith.sitofp %128 : i32 to f32
    %153 = vector.broadcast %152 : f32 to vector<8x32xf32>
    %154 = arith.cmpf olt, %153, %13 : vector<8x32xf32>
    %cst_46 = arith.constant 0.000000e+00 : f32
    %155 = vector.broadcast %cst_46 : f32 to vector<8x32xf32>
    %156 = arith.select %154, %151, %155 : vector<8x32xi1>, vector<8x32xf32>
    %157 = arith.index_cast %128 : i32 to index
    %c0_47 = arith.constant 0 : index
    %c0_48 = arith.constant 0 : index
    %c0_49 = arith.constant 0 : index
    %158 = vector.load %arg5[%157, %c0_47, %c0_48, %c0_49] : memref<4x1x8x32xf32, #tpu.memory_space<vmem>>, vector<1x1x8x32xf32>
    %159 = vector.shape_cast %158 : vector<1x1x8x32xf32> to vector<8x32xf32>
    %160 = vector.shape_cast %156 : vector<8x32xf32> to vector<1x1x8x32xf32>
    tpu.vector_store %arg5[%157, %c0_47, %c0_48, %c0_49], %160 {strides = array<i32>} : memref<4x1x8x32xf32, #tpu.memory_space<vmem>>, vector<1x1x8x32xf32>,
    %161 = arith.select %154, %151, %125 : vector<8x32xi1>, vector<8x32xf32>
    %162 = arith.select %154, %149, %126 : vector<8x32xi1>, vector<8x32xf32>
    %c4_i32_50 = arith.constant 4 : i32
    %c0_51 = arith.constant 0 : index
    %c0_52 = arith.constant 0 : index
    %163 = vector.load %arg8[%c0_51, %c0_52] : memref<8x32xf32, #tpu.memory_space<vmem>>, vector<8x32xf32>
    tpu.vector_store %arg8[%c0_51, %c0_52], %161 {strides = array<i32>} : memref<8x32xf32, #tpu.memory_space<vmem>>, vector<8x32xf32>,
    %c0_53 = arith.constant 0 : index
    %c0_54 = arith.constant 0 : index
    %164 = vector.load %arg9[%c0_53, %c0_54] : memref<8x32xf32, #tpu.memory_space<vmem>>, vector<8x32xf32>
    tpu.vector_store %arg9[%c0_53, %c0_54], %162 {strides = array<i32>} : memref<8x32xf32, #tpu.memory_space<vmem>>, vector<8x32xf32>,
    %c0_55 = arith.constant 0 : index
    %c0_56 = arith.constant 0 : index
    %c0_57 = arith.constant 0 : index
    %165 = vector.load %arg6[%c0_55, %c0_56, %c0_57] : memref<1x8x32xf32, #tpu.memory_space<vmem>>, vector<1x8x32xf32>
    %166 = vector.shape_cast %165 : vector<1x8x32xf32> to vector<8x32xf32>
    %167 = vector.shape_cast %161 : vector<8x32xf32> to vector<1x8x32xf32>
    tpu.vector_store %arg6[%c0_55, %c0_56, %c0_57], %167 {strides = array<i32>} : memref<1x8x32xf32, #tpu.memory_space<vmem>>, vector<1x8x32xf32>,
    %c0_58 = arith.constant 0 : index
    %c0_59 = arith.constant 0 : index
    %c0_60 = arith.constant 0 : index
    %168 = vector.load %arg7[%c0_58, %c0_59, %c0_60] : memref<1x8x32xf32, #tpu.memory_space<vmem>>, vector<1x8x32xf32>
    %169 = vector.shape_cast %168 : vector<1x8x32xf32> to vector<8x32xf32>
    %170 = vector.shape_cast %162 : vector<8x32xf32> to vector<1x8x32xf32>
    tpu.vector_store %arg7[%c0_58, %c0_59, %c0_60], %170 {strides = array<i32>} : memref<1x8x32xf32, #tpu.memory_space<vmem>>, vector<1x8x32xf32>,
    return
  }
  func.func @transform_0(%arg0: i32, %arg1: i32) -> (i32, i32) {
    %c0_i32 = arith.constant 0 : i32
    %c0_i32_0 = arith.constant 0 : i32
    %c0_i32_1 = arith.constant 0 : i32
    return %c0_i32, %c0_i32_0 : i32, i32
  }
  func.func @transform_1(%arg0: i32, %arg1: i32) -> (i32, i32, i32, i32) {
    %c2_i32 = arith.constant 2 : i32
    %0 = arith.muli %c2_i32, %arg1 : i32
    %c2_i32_0 = arith.constant 2 : i32
    %1 = arith.subi %c2_i32_0, %0 : i32
    %2 = arith.muli %arg0, %1 : i32
    %3 = arith.addi %arg1, %2 : i32
    %c0_i32 = arith.constant 0 : i32
    %c0_i32_1 = arith.constant 0 : i32
    %c0_i32_2 = arith.constant 0 : i32
    return %arg0, %3, %c0_i32, %c0_i32_1 : i32, i32, i32, i32
  }
  func.func @transform_2(%arg0: i32, %arg1: i32) -> (i32, i32, i32) {
    %c0_i32 = arith.constant 0 : i32
    %c0_i32_0 = arith.constant 0 : i32
    %c0_i32_1 = arith.constant 0 : i32
    return %arg0, %c0_i32, %c0_i32_0 : i32, i32, i32
  }
  func.func @transform_3(%arg0: i32, %arg1: i32) -> (i32, i32, i32, i32) {
    %c2_i32 = arith.constant 2 : i32
    %0 = arith.muli %c2_i32, %arg1 : i32
    %c2_i32_0 = arith.constant 2 : i32
    %1 = arith.subi %c2_i32_0, %0 : i32
    %2 = arith.muli %arg0, %1 : i32
    %3 = arith.addi %arg1, %2 : i32
    %c0_i32 = arith.constant 0 : i32
    %c0_i32_1 = arith.constant 0 : i32
    %c0_i32_2 = arith.constant 0 : i32
    return %3, %arg0, %c0_i32, %c0_i32_1 : i32, i32, i32, i32
  }
  func.func @transform_4(%arg0: i32, %arg1: i32) -> (i32, i32, i32) {
    %c0_i32 = arith.constant 0 : i32
    %c0_i32_0 = arith.constant 0 : i32
    %c0_i32_1 = arith.constant 0 : i32
    return %arg0, %c0_i32, %c0_i32_0 : i32, i32, i32
  }
  func.func @transform_5(%arg0: i32, %arg1: i32) -> (i32, i32, i32) {
    %c0_i32 = arith.constant 0 : i32
    %c0_i32_0 = arith.constant 0 : i32
    %c0_i32_1 = arith.constant 0 : i32
    return %arg0, %c0_i32, %c0_i32_0 : i32, i32, i32
  }
}

</mosaic_0001>

<llo_original>
// kernel: tpu_custom_call.1
$region0: #{tpu_custom_call.1}
  #allocation0 [shape = 'u32[]', space=smem, size = 0x4, offset = 0x4, fixed_abs, tag = 'smem constant byte address 0x4 - core index']
  #allocation1 [shape = 'u32[144,128]{1,0:T(1,128)}', space=vmem, size = 0x12000, scoped, tag = 'internal scratch']
  #allocation2 [shape = 'f32[8,32]{1,0:T(8,128)}', space=vmem, size = 0x1000, scoped, tag = 'scratch operand']
  #allocation3 [shape = 'f32[8,32]{1,0:T(8,128)}', space=vmem, size = 0x1000, scoped, tag = 'scratch operand']
  %s0 = inlined_call_operand.hbm [shape: f32[8,32], index: 0, kind: input, shape index: {}]
  %s1 = inlined_call_operand.hbm [shape: bf16[2,12,8,128], index: 1, kind: input, shape index: {}]
  %s2 = inlined_call_operand.hbm [shape: bf16[2,32,128], index: 2, kind: input, shape index: {}]
  %s3 = inlined_call_operand.hbm [shape: f32[12,2,8,32], index: 3, kind: output, shape index: {0}]
  %s4 = inlined_call_operand.hbm [shape: f32[2,8,32], index: 4, kind: output, shape index: {1}]
  %s5 = inlined_call_operand.hbm [shape: f32[2,8,32], index: 5, kind: output, shape index: {2}]
  %6 = xla_tuple %s3, %s4, %s5
  %s7 = sld [smem:[#allocation0]]
  $region77: #{tpu_custom_call.1} parent=0
    _
  %s9 = ssub.s32 1, %s7
  %s10 = scalar_select 0, %s9, %s7
  $region1: #{tpu_custom_call.1} parent=0
    #allocation4 [shape = 'u8[4096]{0}', space=vmem, size = 0x1000, scoped, tag = 'input window, operand 0, single buffered']
    #allocation5 [shape = 's32[2]{0}', space=sflag, size = 0x8, scoped, tag = 'scoped memory for tpu_custom_call.1']
    #allocation6 [shape = 's32[2]{0}', space=sflag, size = 0x8, scoped, tag = 'scoped memory for tpu_custom_call.1']
    #allocation7 [shape = 'u8[16384]{0}', space=vmem, size = 0x4000, scoped, tag = 'input window, operand 1']
    #allocation8 [shape = 's32[2]{0}', space=sflag, size = 0x8, scoped, tag = 'scoped memory for tpu_custom_call.1']
    #allocation9 [shape = 'u8[16384]{0}', space=vmem, size = 0x4000, scoped, tag = 'input window, operand 2']
    #allocation10 [shape = 'u8[32768]{0}', space=vmem, size = 0x8000, scoped, tag = 'output window, operand 0']
    #allocation11 [shape = 'u8[8192]{0}', space=vmem, size = 0x2000, scoped, tag = 'output window, operand 1']
    #allocation12 [shape = 's32[2]{0}', space=sflag, size = 0x8, scoped, tag = 'scoped memory for tpu_custom_call.1']
    #allocation13 [shape = 'u8[8192]{0}', space=vmem, size = 0x2000, scoped, tag = 'output window, operand 2']
    %11 = vsyncpa [#allocation5], 0
    %12 = vsyncpa [#allocation8], 0
    %s13 = scalar_lea.sflag [#allocation8], 1
    %14 = vsyncpa %s13, 0
    %15 = vsyncpa [#allocation6], 0
    %s16 = scalar_lea.sflag [#allocation6], 1
    %17 = vsyncpa %s16, 0
    %18 = vsyncpa [#allocation12], 0
    %s19 = scalar_lea.sflag [#allocation12], 1
    %20 = vsyncpa %s19, 0
    loop: start=0, step=1, limit=8
    $region2: #{tpu_custom_call.1} parent=1 // loop_pre_header
      _
    $region3: #{tpu_custom_call.1} parent=1 // loop_header
      %s22 = sphi 0, %s26
      %p23 = scmp.ge.s32.totalorder %s22, 8
      %s29 = sphi 0, %s41
      %s30 = sphi 0, %s37
      %s31 = sphi 0, %s29
      %s32 = sphi 0, %s30
      %s33 = sphi 0, %s31
      %s34 = sphi 0, %s32
      %s42 = sphi 0, %s42
      %s44 = sphi 0, %s42
      %s45 = sphi 0, %s44
      %s59 = sphi 0, %s45
      %s75 = sphi 0, %s77
      %s78 = sphi 0, %s75
      %s79 = sphi 0, %s78
      %s95 = sphi 0, %s79
      %s101 = sphi 0, %s103
      %s104 = sphi 0, %s101
      %s105 = sphi 0, %s104
      %s121 = sphi 0, %s105
      %s137 = sphi 0, %s139
      %s140 = sphi 0, %s137
      %s141 = sphi 0, %s140
      %s157 = sphi 0, %s141
      %s163 = sphi 0, %s165
      %s166 = sphi 0, %s163
      %s167 = sphi 0, %s166
      %s183 = sphi 0, %s167
      %s189 = sphi 0, %s191
      %s192 = sphi 0, %s189
      %s193 = sphi 0, %s192
      %s209 = sphi 0, %s193
    $region4: #{tpu_custom_call.1} parent=1 // loop_header_branch
      %25 = sbr.rel (%p23) target = $region8
    $region5: #{tpu_custom_call.1} parent=1 // loop_body
      %s27 = ssub.s32 %s22, 1
      %s28 = ssub.s32 %s22, 2
      %s35 = sadd.s32 1, %s30
      %p36 = scmp.ge.s32.totalorder %s35, 3
      %s37 = scalar_select %p36, 0, %s35
      %s38 = sadd.s32 1, %s29
      %s39 = scalar_select %p36, %s38, %s29
      %p40 = scmp.ge.s32.totalorder %s39, 2
      %s41 = scalar_select %p40, 0, %s39
      %s43 = sadd.s32 %s42, 1
      %p46 = scmp.eq.s32.totalorder %s22, 5
      %p47 = scmp.ne.s32.totalorder %s42, %s44
      %p48 = scmp.eq.s32.totalorder %s22, 0
      %p49 = por %p47, %p48
      %p50 = scmp.ne.s32.totalorder %s42, %s44
      %p51 = scmp.eq.s32.totalorder %s27, 5
      %p52 = por %p50, %p51
      %p53 = scmp.ne.s32.totalorder %s44, %s45
      %p54 = scmp.eq.s32.totalorder %s27, 0
      %p55 = por %p53, %p54
      %p56 = scmp.ne.s32.totalorder %s44, %s45
      %p57 = scmp.eq.s32.totalorder %s28, 5
      %p58 = por %p56, %p57
      %p60 = scmp.ne.s32.totalorder %s45, %s59
      %p61 = scmp.eq.s32.totalorder %s28, 0
      %p62 = por %p60, %p61
      %s63 = smul.u32 %s30, 2
      %s64 = ssub.s32 2, %s63
      %s65 = smul.u32 %s29, %s64
      %s66 = sadd.s32 %s30, %s65
      %s67 = smul.u32 %s37, 2
      %s68 = ssub.s32 2, %s67
      %s69 = smul.u32 %s41, %s68
      %s70 = sadd.s32 %s37, %s69
      %s71 = ssub.s32 %s29, %s41
      %s72 = ssub.s32 %s66, %s70
      %s73 = sor.u32 %s71, %s72
      %p74 = scmp.eq.s32.totalorder %s73, 0
      %s76 = sadd.s32 %s75, 1
      %s77 = scalar_select %p74, %s75, %s76
      %p80 = pneg %p74
      %p81 = scmp.eq.s32.totalorder %s22, 5
      %p82 = por %p80, %p81
      %p83 = scmp.ne.s32.totalorder %s75, %s78
      %p84 = scmp.eq.s32.totalorder %s22, 0
      %p85 = por %p83, %p84
      %p86 = scmp.ne.s32.totalorder %s75, %s78
      %p87 = scmp.eq.s32.totalorder %s27, 5
      %p88 = por %p86, %p87
      %p89 = scmp.ne.s32.totalorder %s78, %s79
      %p90 = scmp.eq.s32.totalorder %s27, 0
      %p91 = por %p89, %p90
      %p92 = scmp.ne.s32.totalorder %s78, %s79
      %p93 = scmp.eq.s32.totalorder %s28, 5
      %p94 = por %p92, %p93
      %p96 = scmp.ne.s32.totalorder %s79, %s95
      %p97 = scmp.eq.s32.totalorder %s28, 0
      %p98 = por %p96, %p97
      %s99 = ssub.s32 %s29, %s41
      %p100 = scmp.eq.s32.totalorder %s99, 0
      %s102 = sadd.s32 %s101, 1
      %s103 = scalar_select %p100, %s101, %s102
      %p106 = pneg %p100
      %p107 = scmp.eq.s32.totalorder %s22, 5
      %p108 = por %p106, %p107
      %p109 = scmp.ne.s32.totalorder %s101, %s104
      %p110 = scmp.eq.s32.totalorder %s22, 0
      %p111 = por %p109, %p110
      %p112 = scmp.ne.s32.totalorder %s101, %s104
      %p113 = scmp.eq.s32.totalorder %s27, 5
      %p114 = por %p112, %p113
      %p115 = scmp.ne.s32.totalorder %s104, %s105
      %p116 = scmp.eq.s32.totalorder %s27, 0
      %p117 = por %p115, %p116
      %p118 = scmp.ne.s32.totalorder %s104, %s105
      %p119 = scmp.eq.s32.totalorder %s28, 5
      %p120 = por %p118, %p119
      %p122 = scmp.ne.s32.totalorder %s105, %s121
      %p123 = scmp.eq.s32.totalorder %s28, 0
      %p124 = por %p122, %p123
      %s125 = smul.u32 %s30, 2
      %s126 = ssub.s32 2, %s125
      %s127 = smul.u32 %s29, %s126
      %s128 = sadd.s32 %s30, %s127
      %s129 = smul.u32 %s37, 2
      %s130 = ssub.s32 2, %s129
      %s131 = smul.u32 %s41, %s130
      %s132 = sadd.s32 %s37, %s131
      %s133 = ssub.s32 %s128, %s132
      %s134 = ssub.s32 %s29, %s41
      %s135 = sor.u32 %s133, %s134
      %p136 = scmp.eq.s32.totalorder %s135, 0
      %s138 = sadd.s32 %s137, 1
      %s139 = scalar_select %p136, %s137, %s138
      %p142 = pneg %p136
      %p143 = scmp.eq.s32.totalorder %s22, 5
      %p144 = por %p142, %p143
      %p145 = scmp.ne.s32.totalorder %s137, %s140
      %p146 = scmp.eq.s32.totalorder %s22, 0
      %p147 = por %p145, %p146
      %p148 = scmp.ne.s32.totalorder %s137, %s140
      %p149 = scmp.eq.s32.totalorder %s27, 5
      %p150 = por %p148, %p149
      %p151 = scmp.ne.s32.totalorder %s140, %s141
      %p152 = scmp.eq.s32.totalorder %s27, 0
      %p153 = por %p151, %p152
      %p154 = scmp.ne.s32.totalorder %s140, %s141
      %p155 = scmp.eq.s32.totalorder %s28, 5
      %p156 = por %p154, %p155
      %p158 = scmp.ne.s32.totalorder %s141, %s157
      %p159 = scmp.eq.s32.totalorder %s28, 0
      %p160 = por %p158, %p159
      %s161 = ssub.s32 %s29, %s41
      %p162 = scmp.eq.s32.totalorder %s161, 0
      %s164 = sadd.s32 %s163, 1
      %s165 = scalar_select %p162, %s163, %s164
      %p168 = pneg %p162
      %p169 = scmp.eq.s32.totalorder %s22, 5
      %p170 = por %p168, %p169
      %p171 = scmp.ne.s32.totalorder %s163, %s166
      %p172 = scmp.eq.s32.totalorder %s22, 0
      %p173 = por %p171, %p172
      %p174 = scmp.ne.s32.totalorder %s163, %s166
      %p175 = scmp.eq.s32.totalorder %s27, 5
      %p176 = por %p174, %p175
      %p177 = scmp.ne.s32.totalorder %s166, %s167
      %p178 = scmp.eq.s32.totalorder %s27, 0
      %p179 = por %p177, %p178
      %p180 = scmp.ne.s32.totalorder %s166, %s167
      %p181 = scmp.eq.s32.totalorder %s28, 5
      %p182 = por %p180, %p181
      %p184 = scmp.ne.s32.totalorder %s167, %s183
      %p185 = scmp.eq.s32.totalorder %s28, 0
      %p186 = por %p184, %p185
      %s187 = ssub.s32 %s29, %s41
      %p188 = scmp.eq.s32.totalorder %s187, 0
      %s190 = sadd.s32 %s189, 1
      %s191 = scalar_select %p188, %s189, %s190
      %p194 = pneg %p188
      %p195 = scmp.eq.s32.totalorder %s22, 5
      %p196 = por %p194, %p195
      %p197 = scmp.ne.s32.totalorder %s189, %s192
      %p198 = scmp.eq.s32.totalorder %s22, 0
      %p199 = por %p197, %p198
      %p200 = scmp.ne.s32.totalorder %s189, %s192
      %p201 = scmp.eq.s32.totalorder %s27, 5
      %p202 = por %p200, %p201
      %p203 = scmp.ne.s32.totalorder %s192, %s193
      %p204 = scmp.eq.s32.totalorder %s27, 0
      %p205 = por %p203, %p204
      %p206 = scmp.ne.s32.totalorder %s192, %s193
      %p207 = scmp.eq.s32.totalorder %s28, 5
      %p208 = por %p206, %p207
      %p210 = scmp.ne.s32.totalorder %s193, %s209
      %p211 = scmp.eq.s32.totalorder %s28, 0
      %p212 = por %p210, %p211
      %p213 = scmp.le.s32.totalorder 1, %s22
      %p214 = scmp.lt.s32.totalorder %s22, 7
      %p215 = pnand %p213, %p214
      %p216 = pneg %p215
      // Predicated region
      $region9: #{tpu_custom_call.1} parent=5 // pred_check
        _
      $region10: #{tpu_custom_call.1} parent=5 // pred_check_branch
        %218 = sbr.rel (%p215) target = $region12
      $region11: #{tpu_custom_call.1} parent=5 // pred_region
        %s219 = ssub.s32 %s22, 1
        // Predicated region
        $region13: #{tpu_custom_call.1} parent=11 // pred_check
          %p220 = pneg %p55
        $region14: #{tpu_custom_call.1} parent=11 // pred_check_branch
          %222 = sbr.rel (%p220) target = $region16
        $region15: #{tpu_custom_call.1} parent=11 // pred_region
          %s224 = ssub.s32 128, 128
          %225 = vsyncadd [#allocation5], %s224
          %s227 = sshll.u32 [#allocation4], 4
          %s228 = int_to_ptr.vmem [resolvable:$true] %s227
          %230 = dma.hbm_to_vmem [thread:$0]  %s0, 128, %s228, [#allocation5]
        $region16: #{tpu_custom_call.1} parent=11 // pred_fallthru
          _
      $region12: #{tpu_custom_call.1} parent=5 // pred_fallthru
        _
      %p231 = scmp.lt.s32.totalorder %s22, 6
      // Predicated region
      $region17: #{tpu_custom_call.1} parent=5 // pred_check
        %p232 = pneg %p231
      $region18: #{tpu_custom_call.1} parent=5 // pred_check_branch
        %234 = sbr.rel (%p232) target = $region20
      $region19: #{tpu_custom_call.1} parent=5 // pred_region
        // Predicated region
        $region21: #{tpu_custom_call.1} parent=19 // pred_check
          %p235 = pneg %p85
        $region22: #{tpu_custom_call.1} parent=19 // pred_check_branch
          %237 = sbr.rel (%p235) target = $region24
        $region23: #{tpu_custom_call.1} parent=19 // pred_region
          %s238 = sand.u32 %s22, 1
          %s239 = scalar_lea.sflag [#allocation8], %s238
          %s240 = sand.u32 %s75, 1
          %s241 = smul.addr %s240, 16
          %s242 = scalar_lea.vmem [#allocation7], %s241
          %s243 = smul.u32 %s30, 2
          %s244 = ssub.s32 2, %s243
          %s245 = smul.u32 %s29, %s244
          %s246 = sadd.s32 %s30, %s245
          %s247 = smul.u32 4, %s246
          %s249 = ssub.s32 256, 256
          %250 = vsyncadd %s239, %s249
          %s251 = smul.addr %s29, 12
          %s252 = sadd.s32 %s247, %s251
          %s253 = smul.addr %s252, 64
          %s254 = scalar_lea.hbm %s1, %s253
          %s255 = sshll.u32 %s242, 4
          %s256 = int_to_ptr.vmem [resolvable:$true] %s255
          %261 = dma.hbm_to_vmem [thread:$0]  %s254, 256, %s256, %s239, 64, 64, 4
        $region24: #{tpu_custom_call.1} parent=19 // pred_fallthru
          _
        // Predicated region
        $region25: #{tpu_custom_call.1} parent=19 // pred_check
          %p262 = pneg %p111
        $region26: #{tpu_custom_call.1} parent=19 // pred_check_branch
          %264 = sbr.rel (%p262) target = $region28
        $region27: #{tpu_custom_call.1} parent=19 // pred_region
          %s265 = sand.u32 %s22, 1
          %s266 = scalar_lea.sflag [#allocation8], %s265
          %s267 = sand.u32 %s101, 1
          %s268 = smul.addr %s267, 16
          %s269 = scalar_lea.vmem [#allocation9], %s268
          %s271 = ssub.s32 256, 256
          %272 = vsyncadd %s266, %s271
          %s273 = smul.addr %s29, 4
          %s274 = smul.addr %s273, 64
          %s275 = scalar_lea.hbm %s2, %s274
          %s276 = sshll.u32 %s269, 4
          %s277 = int_to_ptr.vmem [resolvable:$true] %s276
          %282 = dma.hbm_to_vmem [thread:$0]  %s275, 256, %s277, %s266, 64, 64, 4
        $region28: #{tpu_custom_call.1} parent=19 // pred_fallthru
          _
      $region20: #{tpu_custom_call.1} parent=5 // pred_fallthru
        _
      %p283 = scmp.le.s32.totalorder 1, %s22
      %p284 = scmp.lt.s32.totalorder %s22, 7
      %p285 = pnand %p283, %p284
      %p286 = pneg %p285
      // Predicated region
      $region29: #{tpu_custom_call.1} parent=5 // pred_check
        _
      $region30: #{tpu_custom_call.1} parent=5 // pred_check_branch
        %288 = sbr.rel (%p285) target = $region32
      $region31: #{tpu_custom_call.1} parent=5 // pred_region
        %s289 = ssub.s32 %s22, 1
        // Predicated region
        $region33: #{tpu_custom_call.1} parent=31 // pred_check
          %p290 = pneg %p55
        $region34: #{tpu_custom_call.1} parent=31 // pred_check_branch
          %292 = sbr.rel (%p290) target = $region36
        $region35: #{tpu_custom_call.1} parent=31 // pred_region
          %293 = dma.done [#allocation5], 128
        $region36: #{tpu_custom_call.1} parent=31 // pred_fallthru
          _
        %s294 = sand.u32 %s27, 1
        %s295 = scalar_lea.sflag [#allocation8], %s294
        %s296 = sand.u32 %s78, 1
        %s297 = smul.addr %s296, 16
        %s298 = scalar_lea.vmem [#allocation7], %s297
        // Predicated region
        $region37: #{tpu_custom_call.1} parent=31 // pred_check
          %p299 = pneg %p91
        $region38: #{tpu_custom_call.1} parent=31 // pred_check_branch
          %301 = sbr.rel (%p299) target = $region40
        $region39: #{tpu_custom_call.1} parent=31 // pred_region
          %302 = dma.done %s295, 256
        $region40: #{tpu_custom_call.1} parent=31 // pred_fallthru
          _
        %s303 = sand.u32 %s27, 1
        %s304 = scalar_lea.sflag [#allocation8], %s303
        %s305 = sand.u32 %s104, 1
        %s306 = smul.addr %s305, 16
        %s307 = scalar_lea.vmem [#allocation9], %s306
        // Predicated region
        $region41: #{tpu_custom_call.1} parent=31 // pred_check
          %p308 = pneg %p117
        $region42: #{tpu_custom_call.1} parent=31 // pred_check_branch
          %310 = sbr.rel (%p308) target = $region44
        $region43: #{tpu_custom_call.1} parent=31 // pred_region
          %311 = dma.done %s304, 256
        $region44: #{tpu_custom_call.1} parent=31 // pred_fallthru
          _
        %p312 = pneg %p55
        %p313 = pneg %p52
        %s314 = sand.u32 %s27, 1
        %s315 = scalar_lea.sflag [#allocation8], %s314
        %s316 = sand.u32 %s78, 1
        %s317 = smul.addr %s316, 16
        %s318 = scalar_lea.vmem [#allocation7], %s317
        %p319 = pneg %p91
        %p320 = pneg %p88
        %s321 = sand.u32 %s27, 1
        %s322 = scalar_lea.sflag [#allocation8], %s321
        %s323 = sand.u32 %s104, 1
        %s324 = smul.addr %s323, 16
        %s325 = scalar_lea.vmem [#allocation9], %s324
        %p326 = pneg %p117
        %p327 = pneg %p114
        %p328 = pneg %p153
        %p329 = pneg %p150
        %s330 = sand.u32 %s140, 1
        %s331 = scalar_lea.sflag [#allocation6], %s330
        %s332 = sand.u32 %s140, 1
        %s333 = smul.addr %s332, 32
        %s334 = scalar_lea.vmem [#allocation10], %s333
        %p335 = pneg %p179
        %p336 = pneg %p176
        %s337 = sand.u32 %s27, 1
        %s338 = scalar_lea.sflag [#allocation12], %s337
        %s339 = sand.u32 %s166, 1
        %s340 = smul.addr %s339, 8
        %s341 = scalar_lea.vmem [#allocation11], %s340
        %p342 = pneg %p205
        %p343 = pneg %p202
        %s344 = sand.u32 %s27, 1
        %s345 = scalar_lea.sflag [#allocation12], %s344
        %s346 = sand.u32 %s192, 1
        %s347 = smul.addr %s346, 8
        %s348 = scalar_lea.vmem [#allocation13], %s347
        %s349 = smul.u32 %s32, 2
        %s350 = ssub.s32 2, %s349
        %s351 = smul.u32 %s31, %s350
        %s352 = sadd.s32 %s32, %s351
        %s353 = smul.u32 4, %s352
        %s354 = smul.u32 %s32, 2
        %s355 = ssub.s32 2, %s354
        %s356 = smul.u32 %s31, %s355
        %s357 = sadd.s32 %s32, %s356
        %s358 = smul.u32 4, %s357
        %p360 = scmp.eq.s32.totalorder %s32, 0
        // Predicated region
        $region45: #{tpu_custom_call.1} parent=31 // pred_check
          %p361 = pneg %p360
        $region46: #{tpu_custom_call.1} parent=31 // pred_check_branch
          %363 = sbr.rel (%p361) target = $region48
        $region47: #{tpu_custom_call.1} parent=31 // pred_region
          %vm364 = vcmask 261120
          %365 = vst.msk [vmem:[#allocation2] sm:$0xff] %vm364, 0.0
          %366 = vst.msk [vmem:[#allocation3] sm:$0xff] %vm364, 0.0
        $region48: #{tpu_custom_call.1} parent=31 // pred_fallthru
          _
        %v367 = vld [vmem:[%s307] sm:$0xf]
        %v368 = vld [vmem:[%s307 + $0x4] sm:$0xf]
        %v369 = vld [vmem:[%s307 + $0x8] sm:$0xf]
        %v370 = vld [vmem:[%s307 + $0xc] sm:$0xf]
        %s371 = smul.u32 %s32, 2
        %s372 = ssub.s32 2, %s371
        %s373 = smul.u32 %s31, %s372
        %s374 = sadd.s32 %s32, %s373
        %v375 = vld [vmem:[#allocation4] sm:$0xff]
        %s376 = smul.u32 %s374, 4
        %s377 = scvt.s32.f32 %s376
        %v378 = vstv %s377
        %v379 = vsub.f32 %v375, %v378
        %s380 = smul.u32 %s31, 3
        %s381 = smul.u32 %s31, 2
        %s382 = ssub.s32 1, %s381
        %v383 = vld [vmem:[#allocation2] sm:$0xff]
        %v384 = vld [vmem:[#allocation3] sm:$0xff]
        %s385 = smul.addr %s380, 4
        %s386 = scalar_lea.vmem %s298, %s385 [#allocation7]
        %v387 = vld [vmem:[%s386] sm:$0xf]
        %v388 = vunpack.c.l.bf16 %v387
        %v389 = vpack.c.bf16 %v383, %v383
        %v394 = vunpack.c.l.b16 %v367
        %v395 = vunpack.c.l.b16 %v368
        %v396 = vunpack.c.l.b16 %v369
        %v397 = vunpack.c.l.b16 %v370
        %v398 = vpack.c.b16 %v395, %v394
        %v399 = vpack.c.b16 %v397, %v396
        %vm402 = vcmask 261120
        %v404 = vsel %vm402, %v389, 0
        %406 = vmatprep.subr.bf16.mxu0 0
        %407 = vmatpush1.bf16.msra.mxu0 %v398
        %408 = vmatprep.subr.bf16.mxu0 0
        %409 = vmatpush1.bf16.msra.mxu0 %v399
        %410 = vmatprep.subr.bf16.mxu0 0
        %411 = vmatpush1.bf16.msra.mxu0 0
        %412 = vmatprep.subr.bf16.mxu0 0
        %413 = vmatpush1.bf16.msra.mxu0 0
        %414 = vmatprep.subr.bf16.mxu0 0
        %415 = vmatpush1.bf16.msra.mxu0 0
        %416 = vmatprep.subr.bf16.mxu0 0
        %417 = vmatpush1.bf16.msra.mxu0 0
        %418 = vmatprep.subr.bf16.mxu0 0
        %419 = vmatpush1.bf16.msra.mxu0 0
        %420 = vmatprep.subr.bf16.mxu0 0
        %421 = vmatpush1.bf16.msra.mxu0 0
        %422 = vmatprep.subr.bf16.mxu0 0
        %423 = vmatpush1.bf16.msra.mxu0 0
        %424 = vmatprep.subr.bf16.mxu0 0
        %425 = vmatpush1.bf16.msra.mxu0 0
        %426 = vmatprep.subr.bf16.mxu0 0
        %427 = vmatpush1.bf16.msra.mxu0 0
        %428 = vmatprep.subr.bf16.mxu0 0
        %429 = vmatpush1.bf16.msra.mxu0 0
        %430 = vmatprep.subr.bf16.mxu0 0
        %431 = vmatpush1.bf16.msra.mxu0 0
        %432 = vmatprep.subr.bf16.mxu0 0
        %433 = vmatpush1.bf16.msra.mxu0 0
        %434 = vmatprep.subr.bf16.mxu0 0
        %435 = vmatpush1.bf16.msra.mxu0 0
        %436 = vmatprep.subr.bf16.mxu0 0
        %437 = vmatpush1.bf16.msra.mxu0 0
        %438 = vmatprep.mubr.bf16.mxu0 0
        %439 = vmatmul.mubr.bf16.gmra.mrb[0].mxu0 %v404
        %v440 = vpop.f32.mrb[0].mxu0
        %v441 = vadd.f32 0.0, %v440
        %v442 = vpop.f32.mrb[0].mxu0
        %v443 = vpop.f32.mrb[0].mxu0
        %v444 = vpop.f32.mrb[0].mxu0
        %445 = vdwg.mxu0
        %v446 = vadd.f32 %v388, %v441
        %v447 = vxor.u32 %v446, 2147483648
        %v448 = vmul.f32 %v447, 1.442695
        %v449 = vpow.pop %v448
        %v450 = vadd.f32 %v449, 1.0
        %v451 = vrcp.pop %v450
        %v452 = vmul.f32 1.0, %v451
        %v453 = vtanh.pop %v446
        %455 = vrot.lane.b32.xlu0 %v384, 32
        %v456 = vpop.permute.xlu0 %455
        %v458 = vmul.f32 %v452, %v456
        %460 = vrot.lane.b32.xlu0 %v453, 32
        %v461 = vpop.permute.xlu0 %460
        %v463 = vmul.f32 %v452, %v461
        %465 = vrot.lane.b32.xlu0 %v463, 32
        %v466 = vpop.permute.xlu0 %465
        %v468 = vadd.f32 %v458, %v466
        %v469 = vtanh.pop %v468
        %471 = vrot.lane.b32.xlu0 %v469, 32
        %v472 = vpop.permute.xlu0 %471
        %v474 = vmul.f32 %v452, %v472
        %s475 = scvt.s32.f32 %s380
        %v476 = vstv %s475
        %vm477 = vcmp.lt.f32.partialorder %v476, %v379
        %479 = vrot.lane.b32.xlu0 %v474, 64
        %v480 = vpop.permute.xlu0 %479
        %v482 = vsel %vm477, %v480, 0.0
        %s483 = smul.u32 %s380, 8
        %s484 = scalar_lea.vmem %s334, %s483 [#allocation10]
        %485 = vst.msk [vmem:[%s484] sm:$0xff] %vm402, %v482
        %v486 = vsel %vm477, %v480, %v383
        %488 = vrot.lane.b32.xlu0 %v468, 96
        %v489 = vpop.permute.xlu0 %488
        %v491 = vsel %vm477, %v489, %v384
        %s492 = sadd.s32 %s380, %s382
        %s493 = smul.addr %s492, 4
        %s494 = scalar_lea.vmem %s298, %s493 [#allocation7]
        %v495 = vld [vmem:[%s494] sm:$0xf]
        %v496 = vunpack.c.l.bf16 %v495
        %v497 = vpack.c.bf16 %v486, %v486
        %v499 = vsel %vm402, %v497, 0
        %501 = vmatprep.subr.bf16.mxu0 0
        %502 = vmatpush1.bf16.msra.mxu0 %v398
        %503 = vmatprep.subr.bf16.mxu0 0
        %504 = vmatpush1.bf16.msra.mxu0 %v399
        %505 = vmatprep.subr.bf16.mxu0 0
        %506 = vmatpush1.bf16.msra.mxu0 0
        %507 = vmatprep.subr.bf16.mxu0 0
        %508 = vmatpush1.bf16.msra.mxu0 0
        %509 = vmatprep.subr.bf16.mxu0 0
        %510 = vmatpush1.bf16.msra.mxu0 0
        %511 = vmatprep.subr.bf16.mxu0 0
        %512 = vmatpush1.bf16.msra.mxu0 0
        %513 = vmatprep.subr.bf16.mxu0 0
        %514 = vmatpush1.bf16.msra.mxu0 0
        %515 = vmatprep.subr.bf16.mxu0 0
        %516 = vmatpush1.bf16.msra.mxu0 0
        %517 = vmatprep.subr.bf16.mxu0 0
        %518 = vmatpush1.bf16.msra.mxu0 0
        %519 = vmatprep.subr.bf16.mxu0 0
        %520 = vmatpush1.bf16.msra.mxu0 0
        %521 = vmatprep.subr.bf16.mxu0 0
        %522 = vmatpush1.bf16.msra.mxu0 0
        %523 = vmatprep.subr.bf16.mxu0 0
        %524 = vmatpush1.bf16.msra.mxu0 0
        %525 = vmatprep.subr.bf16.mxu0 0
        %526 = vmatpush1.bf16.msra.mxu0 0
        %527 = vmatprep.subr.bf16.mxu0 0
        %528 = vmatpush1.bf16.msra.mxu0 0
        %529 = vmatprep.subr.bf16.mxu0 0
        %530 = vmatpush1.bf16.msra.mxu0 0
        %531 = vmatprep.subr.bf16.mxu0 0
        %532 = vmatpush1.bf16.msra.mxu0 0
        %533 = vmatprep.mubr.bf16.mxu0 0
        %534 = vmatmul.mubr.bf16.gmra.mrb[0].mxu0 %v499
        %v535 = vpop.f32.mrb[0].mxu0
        %v536 = vadd.f32 0.0, %v535
        %v537 = vpop.f32.mrb[0].mxu0
        %v538 = vpop.f32.mrb[0].mxu0
        %v539 = vpop.f32.mrb[0].mxu0
        %540 = vdwg.mxu0
        %v541 = vadd.f32 %v496, %v536
        %v542 = vxor.u32 %v541, 2147483648
        %v543 = vmul.f32 %v542, 1.442695
        %v544 = vpow.pop %v543
        %v545 = vadd.f32 %v544, 1.0
        %v546 = vrcp.pop %v545
        %v547 = vmul.f32 1.0, %v546
        %v548 = vtanh.pop %v541
        %550 = vrot.lane.b32.xlu0 %v491, 32
        %v551 = vpop.permute.xlu0 %550
        %v553 = vmul.f32 %v547, %v551
        %555 = vrot.lane.b32.xlu0 %v548, 32
        %v556 = vpop.permute.xlu0 %555
        %v558 = vmul.f32 %v547, %v556
        %560 = vrot.lane.b32.xlu0 %v558, 32
        %v561 = vpop.permute.xlu0 %560
        %v563 = vadd.f32 %v553, %v561
        %v564 = vtanh.pop %v563
        %566 = vrot.lane.b32.xlu0 %v564, 32
        %v567 = vpop.permute.xlu0 %566
        %v569 = vmul.f32 %v547, %v567
        %s570 = scvt.s32.f32 %s492
        %v571 = vstv %s570
        %vm572 = vcmp.lt.f32.partialorder %v571, %v379
        %574 = vrot.lane.b32.xlu0 %v569, 64
        %v575 = vpop.permute.xlu0 %574
        %v577 = vsel %vm572, %v575, 0.0
        %s578 = smul.u32 %s492, 8
        %s579 = scalar_lea.vmem %s334, %s578 [#allocation10]
        %580 = vst.msk [vmem:[%s579] sm:$0xff] %vm402, %v577
        %v581 = vsel %vm572, %v575, %v486
        %583 = vrot.lane.b32.xlu0 %v563, 96
        %v584 = vpop.permute.xlu0 %583
        %v586 = vsel %vm572, %v584, %v491
        %s587 = smul.u32 %s382, 2
        %s588 = sadd.s32 %s380, %s587
        %s589 = smul.addr %s588, 4
        %s590 = scalar_lea.vmem %s298, %s589 [#allocation7]
        %v591 = vld [vmem:[%s590] sm:$0xf]
        %v592 = vunpack.c.l.bf16 %v591
        %v593 = vpack.c.bf16 %v581, %v581
        %v595 = vsel %vm402, %v593, 0
        %597 = vmatprep.subr.bf16.mxu0 0
        %598 = vmatpush1.bf16.msra.mxu0 %v398
        %599 = vmatprep.subr.bf16.mxu0 0
        %600 = vmatpush1.bf16.msra.mxu0 %v399
        %601 = vmatprep.subr.bf16.mxu0 0
        %602 = vmatpush1.bf16.msra.mxu0 0
        %603 = vmatprep.subr.bf16.mxu0 0
        %604 = vmatpush1.bf16.msra.mxu0 0
        %605 = vmatprep.subr.bf16.mxu0 0
        %606 = vmatpush1.bf16.msra.mxu0 0
        %607 = vmatprep.subr.bf16.mxu0 0
        %608 = vmatpush1.bf16.msra.mxu0 0
        %609 = vmatprep.subr.bf16.mxu0 0
        %610 = vmatpush1.bf16.msra.mxu0 0
        %611 = vmatprep.subr.bf16.mxu0 0
        %612 = vmatpush1.bf16.msra.mxu0 0
        %613 = vmatprep.subr.bf16.mxu0 0
        %614 = vmatpush1.bf16.msra.mxu0 0
        %615 = vmatprep.subr.bf16.mxu0 0
        %616 = vmatpush1.bf16.msra.mxu0 0
        %617 = vmatprep.subr.bf16.mxu0 0
        %618 = vmatpush1.bf16.msra.mxu0 0
        %619 = vmatprep.subr.bf16.mxu0 0
        %620 = vmatpush1.bf16.msra.mxu0 0
        %621 = vmatprep.subr.bf16.mxu0 0
        %622 = vmatpush1.bf16.msra.mxu0 0
        %623 = vmatprep.subr.bf16.mxu0 0
        %624 = vmatpush1.bf16.msra.mxu0 0
        %625 = vmatprep.subr.bf16.mxu0 0
        %626 = vmatpush1.bf16.msra.mxu0 0
        %627 = vmatprep.subr.bf16.mxu0 0
        %628 = vmatpush1.bf16.msra.mxu0 0
        %629 = vmatprep.mubr.bf16.mxu0 0
        %630 = vmatmul.mubr.bf16.gmra.mrb[0].mxu0 %v595
        %v631 = vpop.f32.mrb[0].mxu0
        %v632 = vadd.f32 0.0, %v631
        %v633 = vpop.f32.mrb[0].mxu0
        %v634 = vpop.f32.mrb[0].mxu0
        %v635 = vpop.f32.mrb[0].mxu0
        %636 = vdwg.mxu0
        %v637 = vadd.f32 %v592, %v632
        %v638 = vxor.u32 %v637, 2147483648
        %v639 = vmul.f32 %v638, 1.442695
        %v640 = vpow.pop %v639
        %v641 = vadd.f32 %v640, 1.0
        %v642 = vrcp.pop %v641
        %v643 = vmul.f32 1.0, %v642
        %v644 = vtanh.pop %v637
        %646 = vrot.lane.b32.xlu0 %v586, 32
        %v647 = vpop.permute.xlu0 %646
        %v649 = vmul.f32 %v643, %v647
        %651 = vrot.lane.b32.xlu0 %v644, 32
        %v652 = vpop.permute.xlu0 %651
        %v654 = vmul.f32 %v643, %v652
        %656 = vrot.lane.b32.xlu0 %v654, 32
        %v657 = vpop.permute.xlu0 %656
        %v659 = vadd.f32 %v649, %v657
        %v660 = vtanh.pop %v659
        %662 = vrot.lane.b32.xlu0 %v660, 32
        %v663 = vpop.permute.xlu0 %662
        %v665 = vmul.f32 %v643, %v663
        %s666 = scvt.s32.f32 %s588
        %v667 = vstv %s666
        %vm668 = vcmp.lt.f32.partialorder %v667, %v379
        %670 = vrot.lane.b32.xlu0 %v665, 64
        %v671 = vpop.permute.xlu0 %670
        %v673 = vsel %vm668, %v671, 0.0
        %s674 = smul.u32 %s588, 8
        %s675 = scalar_lea.vmem %s334, %s674 [#allocation10]
        %676 = vst.msk [vmem:[%s675] sm:$0xff] %vm402, %v673
        %v677 = vsel %vm668, %v671, %v581
        %679 = vrot.lane.b32.xlu0 %v659, 96
        %v680 = vpop.permute.xlu0 %679
        %v682 = vsel %vm668, %v680, %v586
        %s683 = smul.u32 %s382, 3
        %s684 = sadd.s32 %s380, %s683
        %s685 = smul.addr %s684, 4
        %s686 = scalar_lea.vmem %s298, %s685 [#allocation7]
        %v687 = vld [vmem:[%s686] sm:$0xf]
        %v688 = vunpack.c.l.bf16 %v687
        %v689 = vpack.c.bf16 %v677, %v677
        %v691 = vsel %vm402, %v689, 0
        %693 = vmatprep.subr.bf16.mxu0 0
        %694 = vmatpush1.bf16.msra.mxu0 %v398
        %695 = vmatprep.subr.bf16.mxu0 0
        %696 = vmatpush1.bf16.msra.mxu0 %v399
        %697 = vmatprep.subr.bf16.mxu0 0
        %698 = vmatpush1.bf16.msra.mxu0 0
        %699 = vmatprep.subr.bf16.mxu0 0
        %700 = vmatpush1.bf16.msra.mxu0 0
        %701 = vmatprep.subr.bf16.mxu0 0
        %702 = vmatpush1.bf16.msra.mxu0 0
        %703 = vmatprep.subr.bf16.mxu0 0
        %704 = vmatpush1.bf16.msra.mxu0 0
        %705 = vmatprep.subr.bf16.mxu0 0
        %706 = vmatpush1.bf16.msra.mxu0 0
        %707 = vmatprep.subr.bf16.mxu0 0
        %708 = vmatpush1.bf16.msra.mxu0 0
        %709 = vmatprep.subr.bf16.mxu0 0
        %710 = vmatpush1.bf16.msra.mxu0 0
        %711 = vmatprep.subr.bf16.mxu0 0
        %712 = vmatpush1.bf16.msra.mxu0 0
        %713 = vmatprep.subr.bf16.mxu0 0
        %714 = vmatpush1.bf16.msra.mxu0 0
        %715 = vmatprep.subr.bf16.mxu0 0
        %716 = vmatpush1.bf16.msra.mxu0 0
        %717 = vmatprep.subr.bf16.mxu0 0
        %718 = vmatpush1.bf16.msra.mxu0 0
        %719 = vmatprep.subr.bf16.mxu0 0
        %720 = vmatpush1.bf16.msra.mxu0 0
        %721 = vmatprep.subr.bf16.mxu0 0
        %722 = vmatpush1.bf16.msra.mxu0 0
        %723 = vmatprep.subr.bf16.mxu0 0
        %724 = vmatpush1.bf16.msra.mxu0 0
        %725 = vmatprep.mubr.bf16.mxu0 0
        %726 = vmatmul.mubr.bf16.gmra.mrb[0].mxu0 %v691
        %v727 = vpop.f32.mrb[0].mxu0
        %v728 = vadd.f32 0.0, %v727
        %v729 = vpop.f32.mrb[0].mxu0
        %v730 = vpop.f32.mrb[0].mxu0
        %v731 = vpop.f32.mrb[0].mxu0
        %732 = vdwg.mxu0
        %v733 = vadd.f32 %v688, %v728
        %v734 = vxor.u32 %v733, 2147483648
        %v735 = vmul.f32 %v734, 1.442695
        %v736 = vpow.pop %v735
        %v737 = vadd.f32 %v736, 1.0
        %v738 = vrcp.pop %v737
        %v739 = vmul.f32 1.0, %v738
        %v740 = vtanh.pop %v733
        %742 = vrot.lane.b32.xlu0 %v682, 32
        %v743 = vpop.permute.xlu0 %742
        %v745 = vmul.f32 %v739, %v743
        %747 = vrot.lane.b32.xlu0 %v740, 32
        %v748 = vpop.permute.xlu0 %747
        %v750 = vmul.f32 %v739, %v748
        %752 = vrot.lane.b32.xlu0 %v750, 32
        %v753 = vpop.permute.xlu0 %752
        %v755 = vadd.f32 %v745, %v753
        %v756 = vtanh.pop %v755
        %758 = vrot.lane.b32.xlu0 %v756, 32
        %v759 = vpop.permute.xlu0 %758
        %v761 = vmul.f32 %v739, %v759
        %s762 = scvt.s32.f32 %s684
        %v763 = vstv %s762
        %vm764 = vcmp.lt.f32.partialorder %v763, %v379
        %766 = vrot.lane.b32.xlu0 %v761, 64
        %v767 = vpop.permute.xlu0 %766
        %v769 = vsel %vm764, %v767, 0.0
        %s770 = smul.u32 %s684, 8
        %s771 = scalar_lea.vmem %s334, %s770 [#allocation10]
        %772 = vst.msk [vmem:[%s771] sm:$0xff] %vm402, %v769
        %v773 = vsel %vm764, %v767, %v677
        %775 = vrot.lane.b32.xlu0 %v755, 96
        %v776 = vpop.permute.xlu0 %775
        %v778 = vsel %vm764, %v776, %v682
        %779 = vst.msk [vmem:[#allocation2] sm:$0xff] %vm402, %v773
        %780 = vst.msk [vmem:[#allocation3] sm:$0xff] %vm402, %v778
        %781 = vst.msk [vmem:[%s341] sm:$0xff] %vm402, %v773
        %782 = vst.msk [vmem:[%s348] sm:$0xff] %vm402, %v778
        %s783 = sand.u32 %s140, 1
        %s784 = scalar_lea.sflag [#allocation6], %s783
        %s785 = sand.u32 %s140, 1
        %s786 = smul.addr %s785, 32
        %s787 = scalar_lea.vmem [#allocation10], %s786
        %s788 = sand.u32 %s27, 1
        %s789 = scalar_lea.sflag [#allocation12], %s788
        %s790 = sand.u32 %s166, 1
        %s791 = smul.addr %s790, 8
        %s792 = scalar_lea.vmem [#allocation11], %s791
        %s793 = sand.u32 %s27, 1
        %s794 = scalar_lea.sflag [#allocation12], %s793
        %s795 = sand.u32 %s192, 1
        %s796 = smul.addr %s795, 8
        %s797 = scalar_lea.vmem [#allocation13], %s796
        // Predicated region
        $region49: #{tpu_custom_call.1} parent=31 // pred_check
          %p798 = pneg %p150
        $region50: #{tpu_custom_call.1} parent=31 // pred_check_branch
          %800 = sbr.rel (%p798) target = $region52
        $region51: #{tpu_custom_call.1} parent=31 // pred_region
          %s801 = smul.u32 %s32, 2
          %s802 = ssub.s32 2, %s801
          %s803 = smul.u32 %s31, %s802
          %s804 = sadd.s32 %s32, %s803
          %s805 = smul.u32 4, %s804
          %s807 = ssub.s32 512, 512
          %808 = vsyncadd %s784, %s807
          %s809 = smul.addr %s805, 2
          %s810 = sadd.s32 %s31, %s809
          %s811 = smul.addr %s810, 128
          %s812 = scalar_lea.hbm %s3, %s811
          %s813 = sshll.u32 %s787, 4
          %s814 = int_to_ptr.vmem [resolvable:$true] %s813
          %819 = dma.vmem_to_hbm [thread:$0]  %s814, 512, %s812, %s784, 128, 256, 8
        $region52: #{tpu_custom_call.1} parent=31 // pred_fallthru
          _
        // Predicated region
        $region53: #{tpu_custom_call.1} parent=31 // pred_check
          %p820 = pneg %p176
        $region54: #{tpu_custom_call.1} parent=31 // pred_check_branch
          %822 = sbr.rel (%p820) target = $region56
        $region55: #{tpu_custom_call.1} parent=31 // pred_region
          %s824 = ssub.s32 128, 128
          %825 = vsyncadd %s789, %s824
          %s826 = smul.addr %s31, 128
          %s827 = scalar_lea.hbm %s4, %s826
          %s829 = sshll.u32 %s792, 4
          %s830 = int_to_ptr.vmem [resolvable:$true] %s829
          %832 = dma.vmem_to_hbm [thread:$0]  %s830, 128, %s827, %s789
        $region56: #{tpu_custom_call.1} parent=31 // pred_fallthru
          _
        // Predicated region
        $region57: #{tpu_custom_call.1} parent=31 // pred_check
          %p833 = pneg %p202
        $region58: #{tpu_custom_call.1} parent=31 // pred_check_branch
          %835 = sbr.rel (%p833) target = $region60
        $region59: #{tpu_custom_call.1} parent=31 // pred_region
          %s837 = ssub.s32 128, 128
          %838 = vsyncadd %s794, %s837
          %s839 = smul.addr %s31, 128
          %s840 = scalar_lea.hbm %s5, %s839
          %s842 = sshll.u32 %s797, 4
          %s843 = int_to_ptr.vmem [resolvable:$true] %s842
          %845 = dma.vmem_to_hbm [thread:$0]  %s843, 128, %s840, %s794
        $region60: #{tpu_custom_call.1} parent=31 // pred_fallthru
          _
      $region32: #{tpu_custom_call.1} parent=5 // pred_fallthru
        _
      %p846 = scmp.le.s32.totalorder 2, %s22
      // Predicated region
      $region61: #{tpu_custom_call.1} parent=5 // pred_check
        %p847 = pneg %p846
      $region62: #{tpu_custom_call.1} parent=5 // pred_check_branch
        %849 = sbr.rel (%p847) target = $region64
      $region63: #{tpu_custom_call.1} parent=5 // pred_region
        %s850 = ssub.s32 %s22, 2
        // Predicated region
        $region65: #{tpu_custom_call.1} parent=63 // pred_check
          %p851 = pneg %p156
        $region66: #{tpu_custom_call.1} parent=63 // pred_check_branch
          %853 = sbr.rel (%p851) target = $region68
        $region67: #{tpu_custom_call.1} parent=63 // pred_region
          %s854 = sand.u32 %s141, 1
          %s855 = scalar_lea.sflag [#allocation6], %s854
          %s856 = sand.u32 %s141, 1
          %s857 = smul.addr %s856, 32
          %s858 = scalar_lea.vmem [#allocation10], %s857
          %859 = dma.done %s855, 512
        $region68: #{tpu_custom_call.1} parent=63 // pred_fallthru
          _
        // Predicated region
        $region69: #{tpu_custom_call.1} parent=63 // pred_check
          %p860 = pneg %p182
        $region70: #{tpu_custom_call.1} parent=63 // pred_check_branch
          %862 = sbr.rel (%p860) target = $region72
        $region71: #{tpu_custom_call.1} parent=63 // pred_region
          %s863 = sand.u32 %s28, 1
          %s864 = scalar_lea.sflag [#allocation12], %s863
          %s865 = sand.u32 %s167, 1
          %s866 = smul.addr %s865, 8
          %s867 = scalar_lea.vmem [#allocation11], %s866
          %868 = dma.done %s864, 128
        $region72: #{tpu_custom_call.1} parent=63 // pred_fallthru
          _
        // Predicated region
        $region73: #{tpu_custom_call.1} parent=63 // pred_check
          %p869 = pneg %p208
        $region74: #{tpu_custom_call.1} parent=63 // pred_check_branch
          %871 = sbr.rel (%p869) target = $region76
        $region75: #{tpu_custom_call.1} parent=63 // pred_region
          %s872 = sand.u32 %s28, 1
          %s873 = scalar_lea.sflag [#allocation12], %s872
          %s874 = sand.u32 %s193, 1
          %s875 = smul.addr %s874, 8
          %s876 = scalar_lea.vmem [#allocation13], %s875
          %877 = dma.done %s873, 128
        $region76: #{tpu_custom_call.1} parent=63 // pred_fallthru
          _
      $region64: #{tpu_custom_call.1} parent=5 // pred_fallthru
        _
    $region6: #{tpu_custom_call.1} parent=1 // loop_footer
      %s26 = sadd.s32 1, %s22
    $region7: #{tpu_custom_call.1} parent=1 // loop_footer_branch
      %21 = sbr.rel target = $region3
    $region8: #{tpu_custom_call.1} parent=1 // loop_exit
      _
    %878 = vsyncpa [#allocation5], 1
    %s879 = scalar_lea.sflag [#allocation5], 1
    %880 = vsyncpa %s879, 1
    %881 = vsyncpa [#allocation8], 1
    %s882 = scalar_lea.sflag [#allocation8], 1
    %883 = vsyncpa %s882, 1
    %884 = vsyncpa [#allocation6], 1
    %s885 = scalar_lea.sflag [#allocation6], 1
    %886 = vsyncpa %s885, 1
    %887 = vsyncpa [#allocation12], 1
    %s888 = scalar_lea.sflag [#allocation12], 1
    %889 = vsyncpa %s888, 1

</llo_original>
